<compile_context>
chip_gen: v5e
topology: v5e:2x2
jax: 0.10.0
libtpu: 0.0.40
codegen_flags: <defaults>
</compile_context>

<pallas_src>
import jax
import jax.numpy as jnp
from jax.experimental import pallas as pl
from jax.experimental.pallas import tpu as pltpu


def _round_up(v: int, m: int) -> int:
    return (v + m - 1) // m * m


def tte_mlp_kernel(x_ref, w1_ref, b1_ref, w2h_ref, w2x_ref, b2_ref, out_ref):
    """One batch tile, batch on the sublane axis.

    x_ref  : (BM, F)   input features, native layout (compute dtype)
    w1_ref : (F, Hp)   first Linear weight (compute dtype)
    b1_ref : (1, Hp)   f32
    w2h_ref: (Hp, 1)   f32  (rows of W2 acting on h)
    w2x_ref: (F, 1)    f32  (rows of W2 acting on the residual x)
    b2_ref : (1, 1)    f32
    out_ref: (BM, 1)   f32
    """
    x = x_ref[...]                                                    # (BM, F)

    # --- ResidualLayer: Linear + LeakyReLU(0.01); f32 accumulation on the MXU ---
    h = jnp.dot(x, w1_ref[...], preferred_element_type=jnp.float32)  # (BM, Hp)
    h = h + b1_ref[...]                                               # row-broadcast bias
    h = jnp.maximum(h, 0.01 * h)                                      # leaky_relu

    # --- final Linear over concat([h, x]) == h @ w2h + x @ w2x + b2 (MXU, N=1) ---
    xf = x.astype(jnp.float32)        # small (BM, F) cast; keeps residual path in f32
    y = (jnp.dot(h, w2h_ref[...], preferred_element_type=jnp.float32)
         + jnp.dot(xf, w2x_ref[...], preferred_element_type=jnp.float32)
         + b2_ref[...])                                               # (BM, 1)

    # --- MultiActivationHead: ReLU on the single regression output ---
    out_ref[...] = jnp.maximum(y, 0.0)


def time_event_nn_forward(x, w1, b1, w2, b2, *, block_m=None,
                          compute_dtype=jnp.bfloat16):
    """Forward pass of TimeEventNN.generator in eval mode.

    x : (B, F) float32
    w1: (F, H)     first Linear weight, stored as (in, out)
    b1: (1, H)     first Linear bias
    w2: (H + F, 1) final Linear weight over concat([h, x])
    b2: (1, 1)     final Linear bias
    """
    B, F = x.shape
    H = w1.shape[1]
    assert w2.shape[0] == H + F and w2.shape[1] == 1

    LANE = 128
    SUB = 8
    f32 = jnp.float32
    Hp = _round_up(H, LANE)

    # ---- batch tile selection ----
    if block_m is None:
        try:
            vmem_cap = pltpu.get_tpu_info().vmem_capacity_bytes
        except Exception:
            vmem_cap = 64 << 20
        block_m = 2048 if vmem_cap >= (96 << 20) else 1024
    block_m = max(SUB, _round_up(block_m, LANE))
    if B > LANE:
        # Keep >= 2 grid steps when B is large so the "parallel" batch axis can
        # shard across v7x's two TensorCores (no effect on 1-TC v5e/v6e).
        block_m = min(block_m, _round_up(pl.cdiv(B, 2), LANE))
    else:
        block_m = min(block_m, _round_up(B, SUB))
    grid = (pl.cdiv(B, block_m),)

    # ---- operands: X streamed untouched; weights are tiny (one-off pad/cast) ----
    x_c = x if x.dtype == compute_dtype else x.astype(compute_dtype)
    w1_p = jnp.zeros((F, Hp), compute_dtype).at[:, :H].set(w1.astype(compute_dtype))
    b1_row = jnp.zeros((1, Hp), f32).at[0, :H].set(jnp.asarray(b1, f32).reshape(-1))
    w2h_col = jnp.zeros((Hp, 1), f32).at[:H, :].set(jnp.asarray(w2[:H], f32))
    w2x_col = jnp.asarray(w2[H:], f32).reshape(F, 1)
    b2_mat = jnp.asarray(b2, f32).reshape(1, 1)

    # ---- explicit VMEM budget (lane-padded blocks, default double-buffering) ----
    in_bytes = jnp.dtype(compute_dtype).itemsize
    est = (2 * block_m * max(F, LANE) * in_bytes             # X tiles
           + 2 * max(F, SUB) * Hp * in_bytes                 # W1
           + 2 * (SUB * Hp + Hp * LANE + max(F, SUB) * LANE + SUB * LANE) * 4
           + 2 * block_m * LANE * 4                          # output tiles
           + 4 * block_m * Hp * 4)                           # h / matmul temporaries
    vmem_limit = int(min(48 << 20, max(2 * est, 16 << 20)))  # safe on v7x (64 MiB phys)

    out = pl.pallas_call(
        tte_mlp_kernel,
        out_shape=jax.ShapeDtypeStruct((B, 1), f32),
        grid=grid,
        in_specs=[
            pl.BlockSpec((block_m, F), lambda i: (i, 0)),    # X tile (streamed, native)
            pl.BlockSpec((F, Hp), lambda i: (0, 0)),         # W1 (resident)
            pl.BlockSpec((1, Hp), lambda i: (0, 0)),         # b1
            pl.BlockSpec((Hp, 1), lambda i: (0, 0)),         # W2 (h part)
            pl.BlockSpec((F, 1), lambda i: (0, 0)),          # W2 (x part)
            pl.BlockSpec((1, 1), lambda i: (0, 0)),          # b2
        ],
        out_specs=pl.BlockSpec((block_m, 1), lambda i: (i, 0)),
        compiler_params=pltpu.CompilerParams(
            dimension_semantics=("parallel",),               # independent batch tiles
            vmem_limit_bytes=vmem_limit,
        ),
    )(x_c, w1_p, b1_row, w2h_col, w2x_col, b2_mat)

    return out


def reference_forward(x, w1, b1, w2, b2):
    hp = jax.lax.Precision.HIGHEST
    h = jnp.dot(x, w1, precision=hp) + b1
    h = jnp.where(h > 0, h, 0.01 * h)
    hc = jnp.concatenate([h, x], axis=-1)
    y = jnp.dot(hc, w2, precision=hp) + b2
    return jnp.maximum(y, 0.0)


if __name__ == "__main__":
    # Small shapes consistent with the module (n_features, n_units_hidden scaled
    # down); B deliberately not a multiple of 128 to exercise the tile-cap path.
    B, F, H = 64, 16, 32

    key = jax.random.PRNGKey(0)
    kx, k1, kb1, k2, kb2 = jax.random.split(key, 5)

    x = jax.random.normal(kx, (B, F), dtype=jnp.float32)

    # PyTorch-style uniform(-1/sqrt(fan_in), 1/sqrt(fan_in)) init.
    bound1 = 1.0 / (F ** 0.5)
    w1 = jax.random.uniform(k1, (F, H), jnp.float32, -bound1, bound1)
    b1 = jax.random.uniform(kb1, (1, H), jnp.float32, -bound1, bound1)

    bound2 = 1.0 / ((H + F) ** 0.5)
    w2 = jax.random.uniform(k2, (H + F, 1), jnp.float32, -bound2, bound2)
    b2 = jax.random.uniform(kb2, (1, 1), jnp.float32, -bound2, bound2)

    ref = reference_forward(x, w1, b1, w2, b2)

    # Default path: bf16 MXU operands, f32 accumulation (dtype-aware tolerance).
    out_bf16 = time_event_nn_forward(x, w1, b1, w2, b2)
    out_bf16 = jax.block_until_ready(out_bf16)
    assert out_bf16.shape == (B, 1)
    assert jnp.allclose(out_bf16, ref, atol=2.5e-2, rtol=2e-2), "bf16 mismatch vs reference"

    # Exact-stream path: f32 operands end-to-end (tighter tolerance).
    # (In-kernel f32 dot uses Mosaic's default f32 MXU path, not HIGHEST precision.)
    out_f32 = time_event_nn_forward(x, w1, b1, w2, b2, compute_dtype=jnp.float32)
    out_f32 = jax.block_until_ready(out_f32)
    assert out_f32.shape == (B, 1)
    assert jnp.allclose(out_f32, ref, atol=1e-3, rtol=1e-3), "f32 mismatch vs reference"

    print("KERNEL_OK")
</pallas_src>

<mosaic_0001>
module attributes {stable_mosaic.version = 11 : i64} {
  func.func @tte_mlp_kernel(%arg0: i32, %arg1: memref<64x16xbf16, #tpu.memory_space<vmem>>, %arg2: memref<16x128xbf16, #tpu.memory_space<vmem>>, %arg3: memref<1x128xf32, #tpu.memory_space<vmem>>, %arg4: memref<128x1xf32, #tpu.memory_space<vmem>>, %arg5: memref<16x1xf32, #tpu.memory_space<vmem>>, %arg6: memref<1x1xf32, #tpu.memory_space<vmem>>, %arg7: memref<64x1xf32, #tpu.memory_space<vmem>>) attributes {dimension_semantics = [#tpu.dimension_semantics<parallel>], iteration_bounds = array<i64: 1>, scalar_prefetch = 0 : i64, scratch_operands = 0 : i64, tpu.core_type = #tpu.core_type<tc>, window_params = [{transform_indices = @transform_0, window_bounds = array<i64: 64, 16>}, {pipeline_mode = #tpu.pipeline_mode<synchronous>, transform_indices = @transform_1, window_bounds = array<i64: 16, 128>}, {pipeline_mode = #tpu.pipeline_mode<synchronous>, transform_indices = @transform_2, window_bounds = array<i64: 1, 128>}, {pipeline_mode = #tpu.pipeline_mode<synchronous>, transform_indices = @transform_3, window_bounds = array<i64: 128, 1>}, {pipeline_mode = #tpu.pipeline_mode<synchronous>, transform_indices = @transform_4, window_bounds = array<i64: 16, 1>}, {pipeline_mode = #tpu.pipeline_mode<synchronous>, transform_indices = @transform_5, window_bounds = array<i64: 1, 1>}, {transform_indices = @transform_6, window_bounds = array<i64: 64, 1>}]} {
    %c0 = arith.constant 0 : index
    %c0_0 = arith.constant 0 : index
    %0 = vector.load %arg1[%c0, %c0_0] : memref<64x16xbf16, #tpu.memory_space<vmem>>, vector<64x16xbf16>
    %c0_1 = arith.constant 0 : index
    %c0_2 = arith.constant 0 : index
    %1 = vector.load %arg2[%c0_1, %c0_2] : memref<16x128xbf16, #tpu.memory_space<vmem>>, vector<16x128xbf16>
    %cst = arith.constant dense<0.000000e+00> : vector<64x128xf32>
    %2 = tpu.matmul %0, %1, %cst {dimension_numbers = #tpu.dot_dimension_numbers<[1], [0], [0], [1], [0, 0, 1, 1], [], []>} : vector<64x16xbf16>, vector<16x128xbf16>, vector<64x128xf32> -> vector<64x128xf32>
    %c0_3 = arith.constant 0 : index
    %c0_4 = arith.constant 0 : index
    %3 = vector.load %arg3[%c0_3, %c0_4] : memref<1x128xf32, #tpu.memory_space<vmem>>, vector<1x128xf32>
    %4 = vector.broadcast %3 : vector<1x128xf32> to vector<64x128xf32>
    %5 = arith.addf %2, %4 : vector<64x128xf32>
    %cst_5 = arith.constant 0.00999999977 : f32
    %6 = vector.broadcast %cst_5 : f32 to vector<64x128xf32>
    %7 = arith.mulf %6, %5 : vector<64x128xf32>
    %8 = arith.maximumf %5, %7 : vector<64x128xf32>
    %9 = arith.extf %0 : vector<64x16xbf16> to vector<64x16xf32>
    %c0_6 = arith.constant 0 : index
    %c0_7 = arith.constant 0 : index
    %10 = vector.load %arg4[%c0_6, %c0_7] : memref<128x1xf32, #tpu.memory_space<vmem>>, vector<128x1xf32>
    %cst_8 = arith.constant dense<0.000000e+00> : vector<64x1xf32>
    %11 = tpu.matmul %8, %10, %cst_8 {dimension_numbers = #tpu.dot_dimension_numbers<[1], [0], [0], [1], [0, 0, 1, 1], [], []>} : vector<64x128xf32>, vector<128x1xf32>, vector<64x1xf32> -> vector<64x1xf32>
    %c0_9 = arith.constant 0 : index
    %c0_10 = arith.constant 0 : index
    %12 = vector.load %arg5[%c0_9, %c0_10] : memref<16x1xf32, #tpu.memory_space<vmem>>, vector<16x1xf32>
    %cst_11 = arith.constant dense<0.000000e+00> : vector<64x1xf32>
    %13 = tpu.matmul %9, %12, %cst_11 {dimension_numbers = #tpu.dot_dimension_numbers<[1], [0], [0], [1], [0, 0, 1, 1], [], []>} : vector<64x16xf32>, vector<16x1xf32>, vector<64x1xf32> -> vector<64x1xf32>
    %14 = arith.addf %11, %13 : vector<64x1xf32>
    %c0_12 = arith.constant 0 : index
    %c0_13 = arith.constant 0 : index
    %15 = vector.load %arg6[%c0_12, %c0_13] : memref<1x1xf32, #tpu.memory_space<vmem>>, vector<1x1xf32>
    %16 = vector.broadcast %15 : vector<1x1xf32> to vector<64x1xf32>
    %17 = arith.addf %14, %16 : vector<64x1xf32>
    %cst_14 = arith.constant 0.000000e+00 : f32
    %18 = vector.broadcast %cst_14 : f32 to vector<64x1xf32>
    %19 = arith.maximumf %17, %18 : vector<64x1xf32>
    %c0_15 = arith.constant 0 : index
    %c0_16 = arith.constant 0 : index
    %20 = vector.load %arg7[%c0_15, %c0_16] : memref<64x1xf32, #tpu.memory_space<vmem>>, vector<64x1xf32>
    tpu.vector_store %arg7[%c0_15, %c0_16], %19 {strides = array<i32>} : memref<64x1xf32, #tpu.memory_space<vmem>>, vector<64x1xf32>,
    return
  }
  func.func @transform_0(%arg0: i32) -> (i32, i32) {
    %c0_i32 = arith.constant 0 : i32
    %c0_i32_0 = arith.constant 0 : i32
    return %arg0, %c0_i32 : i32, i32
  }
  func.func @transform_1(%arg0: i32) -> (i32, i32) {
    %c0_i32 = arith.constant 0 : i32
    %c0_i32_0 = arith.constant 0 : i32
    %c0_i32_1 = arith.constant 0 : i32
    return %c0_i32, %c0_i32_0 : i32, i32
  }
  func.func @transform_2(%arg0: i32) -> (i32, i32) {
    %c0_i32 = arith.constant 0 : i32
    %c0_i32_0 = arith.constant 0 : i32
    %c0_i32_1 = arith.constant 0 : i32
    return %c0_i32, %c0_i32_0 : i32, i32
  }
  func.func @transform_3(%arg0: i32) -> (i32, i32) {
    %c0_i32 = arith.constant 0 : i32
    %c0_i32_0 = arith.constant 0 : i32
    %c0_i32_1 = arith.constant 0 : i32
    return %c0_i32, %c0_i32_0 : i32, i32
  }
  func.func @transform_4(%arg0: i32) -> (i32, i32) {
    %c0_i32 = arith.constant 0 : i32
    %c0_i32_0 = arith.constant 0 : i32
    %c0_i32_1 = arith.constant 0 : i32
    return %c0_i32, %c0_i32_0 : i32, i32
  }
  func.func @transform_5(%arg0: i32) -> (i32, i32) {
    %c0_i32 = arith.constant 0 : i32
    %c0_i32_0 = arith.constant 0 : i32
    %c0_i32_1 = arith.constant 0 : i32
    return %c0_i32, %c0_i32_0 : i32, i32
  }
  func.func @transform_6(%arg0: i32) -> (i32, i32) {
    %c0_i32 = arith.constant 0 : i32
    %c0_i32_0 = arith.constant 0 : i32
    return %arg0, %c0_i32 : i32, i32
  }
}

</mosaic_0001>

<llo_original>
// kernel: tpu_custom_call.1
$region0: #{tpu_custom_call.1}
  #allocation0 [shape = 'u32[]', space=smem, size = 0x4, offset = 0x4, fixed_abs, tag = 'smem constant byte address 0x4 - core index']
  #allocation1 [shape = 'u32[72,128]{1,0:T(1,128)}', space=vmem, size = 0x9000, scoped, tag = 'internal scratch']
  #allocation2 [shape = 'f32[1,1]{1,0:T(1,128)S(1)}', space=vmem, size = 0x200, scoped, tag = 'scoped memory for tpu_custom_call.1']
  %s0 = inlined_call_operand.vmem [shape: bf16[64,16], index: 0, kind: input, shape index: {}]
  %s1 = inlined_call_operand.vmem [shape: bf16[16,128], index: 1, kind: input, shape index: {}]
  %s2 = inlined_call_operand.vmem [shape: f32[1,128], index: 2, kind: input, shape index: {}]
  %s3 = inlined_call_operand.vmem [shape: f32[128,1], index: 3, kind: input, shape index: {}]
  %s4 = inlined_call_operand.vmem [shape: f32[16,1], index: 4, kind: input, shape index: {}]
  %s5 = inlined_call_operand.<no memory space> [shape: f32[1,1], index: 5, kind: input, shape index: {}]
  %s6 = inlined_call_operand.vmem [shape: f32[64,1], index: 6, kind: output, shape index: {}]
  %s7 = sld [smem:[#allocation0]]
  $region34: #{tpu_custom_call.1} parent=0
    _
  %s9 = ssub.s32 1, %s7
  %s10 = scalar_select 0, %s9, %s7
  %v11 = vstv %s5
  %12 = vst [vmem:[#allocation2] sm:$0x1] %v11
  // Predicated region
  $region2: #{tpu_custom_call.1} parent=0 // pred_check
    _
  $region3: #{tpu_custom_call.1} parent=0 // pred_check_branch
    %14 = sbr.rel (0) target = $region5
  $region4: #{tpu_custom_call.1} parent=0 // pred_region
    _
  $region5: #{tpu_custom_call.1} parent=0 // pred_fallthru
    _
  // Predicated region
  $region6: #{tpu_custom_call.1} parent=0 // pred_check
    _
  $region7: #{tpu_custom_call.1} parent=0 // pred_check_branch
    %16 = sbr.rel (0) target = $region9
  $region8: #{tpu_custom_call.1} parent=0 // pred_region
    _
  $region9: #{tpu_custom_call.1} parent=0 // pred_fallthru
    _
  // Predicated region
  $region10: #{tpu_custom_call.1} parent=0 // pred_check
    _
  $region11: #{tpu_custom_call.1} parent=0 // pred_check_branch
    %18 = sbr.rel (0) target = $region13
  $region12: #{tpu_custom_call.1} parent=0 // pred_region
    _
  $region13: #{tpu_custom_call.1} parent=0 // pred_fallthru
    _
  // Predicated region
  $region14: #{tpu_custom_call.1} parent=0 // pred_check
    _
  $region15: #{tpu_custom_call.1} parent=0 // pred_check_branch
    %20 = sbr.rel (0) target = $region17
  $region16: #{tpu_custom_call.1} parent=0 // pred_region
    _
  $region17: #{tpu_custom_call.1} parent=0 // pred_fallthru
    _
  // Predicated region
  $region18: #{tpu_custom_call.1} parent=0 // pred_check
    _
  $region19: #{tpu_custom_call.1} parent=0 // pred_check_branch
    %22 = sbr.rel (0) target = $region21
  $region20: #{tpu_custom_call.1} parent=0 // pred_region
    _
  $region21: #{tpu_custom_call.1} parent=0 // pred_fallthru
    _
  // Predicated region
  $region22: #{tpu_custom_call.1} parent=0 // pred_check
    _
  $region23: #{tpu_custom_call.1} parent=0 // pred_check_branch
    %24 = sbr.rel (0) target = $region25
  $region24: #{tpu_custom_call.1} parent=0 // pred_region
    _
  $region25: #{tpu_custom_call.1} parent=0 // pred_fallthru
    _
  %v26 = vld [vmem:[%s0] sm:$0xf]
  %v27 = vld [vmem:[%s0 + $0x4] sm:$0xf]
  %v28 = vld [vmem:[%s0 + $0x8] sm:$0xf]
  %v29 = vld [vmem:[%s0 + $0xc] sm:$0xf]
  %v30 = vld [vmem:[%s0 + $0x10] sm:$0xf]
  %v31 = vld [vmem:[%s0 + $0x14] sm:$0xf]
  %v32 = vld [vmem:[%s0 + $0x18] sm:$0xf]
  %v33 = vld [vmem:[%s0 + $0x1c] sm:$0xf]
  %v34 = vld [vmem:[%s1] sm:$0xf]
  %v35 = vld [vmem:[%s1 + $0x4] sm:$0xf]
  %v36 = vld [vmem:[%s2] sm:$0x1]
  %v38 = vperm.slane %v36, 0
  %v48 = vunpack.c.l.b16 %v26
  %v49 = vunpack.c.l.b16 %v27
  %v50 = vunpack.c.l.b16 %v28
  %v51 = vunpack.c.l.b16 %v29
  %v52 = vunpack.c.l.b16 %v30
  %v53 = vunpack.c.l.b16 %v31
  %v54 = vunpack.c.l.b16 %v32
  %v55 = vunpack.c.l.b16 %v33
  %v56 = vpack.c.b16 %v49, %v48
  %v57 = vpack.c.b16 %v51, %v50
  %v58 = vpack.c.b16 %v53, %v52
  %v59 = vpack.c.b16 %v55, %v54
  %v62 = vunpack.c.l.b16 %v34
  %v63 = vunpack.c.l.b16 %v35
  %v64 = vpack.c.b16 %v63, %v62
  %vm66 = vcmask 130048
  %v68 = vsel %vm66, %v56, 0
  %v71 = vsel %vm66, %v57, 0
  %v74 = vsel %vm66, %v58, 0
  %v77 = vsel %vm66, %v59, 0
  %79 = vmatpush.bf16.msra.mxu0 0
  %80 = vmatpush.bf16.msra.mxu0 0
  %81 = vmatpush.bf16.msra.mxu0 0
  %82 = vmatpush.bf16.msra.mxu0 0
  %83 = vmatpush.bf16.msra.mxu0 0
  %84 = vmatpush.bf16.msra.mxu0 0
  %85 = vmatpush.bf16.msra.mxu0 0
  %86 = vmatpush.bf16.msra.mxu0 %v64
  %87 = vmatmul.bf16.gmra.mxu0 %v68
  %v88 = vpop.f32.mrf.mxu0
  %v89 = vadd.f32 %v38, %v88
  %v90 = vpop.f32.mrf.mxu0
  %v91 = vadd.f32 %v38, %v90
  %92 = vmatmul.bf16.gmra.mxu0 %v71
  %v93 = vpop.f32.mrf.mxu0
  %v94 = vadd.f32 %v38, %v93
  %v95 = vpop.f32.mrf.mxu0
  %v96 = vadd.f32 %v38, %v95
  %97 = vmatmul.bf16.gmra.mxu0 %v74
  %v98 = vpop.f32.mrf.mxu0
  %v99 = vadd.f32 %v38, %v98
  %v100 = vpop.f32.mrf.mxu0
  %v101 = vadd.f32 %v38, %v100
  %102 = vmatmul.bf16.gmra.mxu0 %v77
  %v103 = vpop.f32.mrf.mxu0
  %v104 = vadd.f32 %v38, %v103
  %v105 = vpop.f32.mrf.mxu0
  %v106 = vadd.f32 %v38, %v105
  %107 = vdwg.mxu0
  %v108 = vmul.f32 %v89, 0.01
  %v109 = vmul.f32 %v91, 0.01
  %v110 = vmul.f32 %v94, 0.01
  %v111 = vmul.f32 %v96, 0.01
  %v112 = vmul.f32 %v99, 0.01
  %v113 = vmul.f32 %v101, 0.01
  %v114 = vmul.f32 %v104, 0.01
  %v115 = vmul.f32 %v106, 0.01
  %v116 = vmax.f32 %v89, %v108
  %v117 = vmax.f32 %v91, %v109
  %v118 = vmax.f32 %v94, %v110
  %v119 = vmax.f32 %v96, %v111
  %v120 = vmax.f32 %v99, %v112
  %v121 = vmax.f32 %v101, %v113
  %v122 = vmax.f32 %v104, %v114
  %v123 = vmax.f32 %v106, %v115
  %v124 = vunpack.c.l.bf16 %v26
  %v125 = vunpack.c.l.bf16 %v27
  %v126 = vunpack.c.l.bf16 %v28
  %v127 = vunpack.c.l.bf16 %v29
  %v128 = vunpack.c.l.bf16 %v30
  %v129 = vunpack.c.l.bf16 %v31
  %v130 = vunpack.c.l.bf16 %v32
  %v131 = vunpack.c.l.bf16 %v33
  %v132 = vld [vmem:[%s3] sm:$0xff]
  %v133 = vld [vmem:[%s3 + $0x8] sm:$0xff]
  %v134 = vld [vmem:[%s3 + $0x10] sm:$0xff]
  %v135 = vld [vmem:[%s3 + $0x18] sm:$0xff]
  %v136 = vld [vmem:[%s3 + $0x20] sm:$0xff]
  %v137 = vld [vmem:[%s3 + $0x28] sm:$0xff]
  %v138 = vld [vmem:[%s3 + $0x30] sm:$0xff]
  %v139 = vld [vmem:[%s3 + $0x38] sm:$0xff]
  %v140 = vld [vmem:[%s3 + $0x40] sm:$0xff]
  %v141 = vld [vmem:[%s3 + $0x48] sm:$0xff]
  %v142 = vld [vmem:[%s3 + $0x50] sm:$0xff]
  %v143 = vld [vmem:[%s3 + $0x58] sm:$0xff]
  %v144 = vld [vmem:[%s3 + $0x60] sm:$0xff]
  %v145 = vld [vmem:[%s3 + $0x68] sm:$0xff]
  %v146 = vld [vmem:[%s3 + $0x70] sm:$0xff]
  %v147 = vld [vmem:[%s3 + $0x78] sm:$0xff]
  %v148 = vld [vmem:[%s4] sm:$0xff]
  %v149 = vld [vmem:[%s4 + $0x8] sm:$0xff]
  %v151 = vsel %vm66, %v124, 0
  %v154 = vsel %vm66, %v125, 0
  %v157 = vsel %vm66, %v126, 0
  %v160 = vsel %vm66, %v127, 0
  %v163 = vsel %vm66, %v128, 0
  %v166 = vsel %vm66, %v129, 0
  %v169 = vsel %vm66, %v130, 0
  %v172 = vsel %vm66, %v131, 0
  %174 = vmatpush.msra.mxu0 0.0
  %175 = vmatpush.msra.mxu0 0.0
  %176 = vmatpush.msra.mxu0 0.0
  %177 = vmatpush.msra.mxu0 0.0
  %178 = vmatpush.msra.mxu0 0.0
  %179 = vmatpush.msra.mxu0 0.0
  %180 = vmatpush.msra.mxu0 0.0
  %181 = vmatpush.msra.mxu0 0.0
  %182 = vmatpush.msra.mxu0 0.0
  %183 = vmatpush.msra.mxu0 0.0
  %184 = vmatpush.msra.mxu0 0.0
  %185 = vmatpush.msra.mxu0 0.0
  %186 = vmatpush.msra.mxu0 0.0
  %187 = vmatpush.msra.mxu0 0.0
  %188 = vmatpush.msra.mxu0 %v149
  %189 = vmatpush.msra.mxu0 %v148
  %190 = vmatmul.f32.gmra.mxu0 %v151
  %v191 = vpop.f32.mrf.mxu0
  %v192 = vadd.f32 0.0, %v191
  %193 = vmatmul.f32.gmra.mxu0 %v154
  %v194 = vpop.f32.mrf.mxu0
  %v195 = vadd.f32 0.0, %v194
  %196 = vmatmul.f32.gmra.mxu0 %v157
  %v197 = vpop.f32.mrf.mxu0
  %v198 = vadd.f32 0.0, %v197
  %199 = vmatmul.f32.gmra.mxu0 %v160
  %v200 = vpop.f32.mrf.mxu0
  %v201 = vadd.f32 0.0, %v200
  %202 = vmatmul.f32.gmra.mxu0 %v163
  %v203 = vpop.f32.mrf.mxu0
  %v204 = vadd.f32 0.0, %v203
  %205 = vmatmul.f32.gmra.mxu0 %v166
  %v206 = vpop.f32.mrf.mxu0
  %v207 = vadd.f32 0.0, %v206
  %208 = vmatmul.f32.gmra.mxu0 %v169
  %v209 = vpop.f32.mrf.mxu0
  %v210 = vadd.f32 0.0, %v209
  %211 = vmatmul.f32.gmra.mxu0 %v172
  %v212 = vpop.f32.mrf.mxu0
  %v213 = vadd.f32 0.0, %v212
  %214 = vdwg.mxu0
  %215 = vmatpush.msra.mxu0 %v147
  %216 = vmatpush.msra.mxu0 %v146
  %217 = vmatpush.msra.mxu0 %v145
  %218 = vmatpush.msra.mxu0 %v144
  %219 = vmatpush.msra.mxu0 %v143
  %220 = vmatpush.msra.mxu0 %v142
  %221 = vmatpush.msra.mxu0 %v141
  %222 = vmatpush.msra.mxu0 %v140
  %223 = vmatpush.msra.mxu0 %v139
  %224 = vmatpush.msra.mxu0 %v138
  %225 = vmatpush.msra.mxu0 %v137
  %226 = vmatpush.msra.mxu0 %v136
  %227 = vmatpush.msra.mxu0 %v135
  %228 = vmatpush.msra.mxu0 %v134
  %229 = vmatpush.msra.mxu0 %v133
  %230 = vmatpush.msra.mxu0 %v132
  %231 = vmatmul.f32.gmra.mxu0 %v116
  %v232 = vpop.f32.mrf.mxu0
  %v233 = vadd.f32 %v192, %v232
  %234 = vmatmul.f32.gmra.mxu0 %v117
  %v235 = vpop.f32.mrf.mxu0
  %v236 = vadd.f32 %v195, %v235
  %237 = vmatmul.f32.gmra.mxu0 %v118
  %v238 = vpop.f32.mrf.mxu0
  %v239 = vadd.f32 %v198, %v238
  %240 = vmatmul.f32.gmra.mxu0 %v119
  %v241 = vpop.f32.mrf.mxu0
  %v242 = vadd.f32 %v201, %v241
  %243 = vmatmul.f32.gmra.mxu0 %v120
  %v244 = vpop.f32.mrf.mxu0
  %v245 = vadd.f32 %v204, %v244
  %246 = vmatmul.f32.gmra.mxu0 %v121
  %v247 = vpop.f32.mrf.mxu0
  %v248 = vadd.f32 %v207, %v247
  %249 = vmatmul.f32.gmra.mxu0 %v122
  %v250 = vpop.f32.mrf.mxu0
  %v251 = vadd.f32 %v210, %v250
  %252 = vmatmul.f32.gmra.mxu0 %v123
  %v253 = vpop.f32.mrf.mxu0
  %v254 = vadd.f32 %v213, %v253
  %255 = vdwg.mxu0
  %v256 = vld [vmem:[#allocation2] sm:$0x1]
  %v258 = vperm.slane %v256, 0
  %v260 = vadd.f32 %v233, %v258
  %v261 = vadd.f32 %v236, %v258
  %v262 = vadd.f32 %v239, %v258
  %v263 = vadd.f32 %v242, %v258
  %v264 = vadd.f32 %v245, %v258
  %v265 = vadd.f32 %v248, %v258
  %v266 = vadd.f32 %v251, %v258
  %v267 = vadd.f32 %v254, %v258
  %v268 = vmax.f32 %v260, 0.0
  %v269 = vmax.f32 %v261, 0.0
  %v270 = vmax.f32 %v262, 0.0
  %v271 = vmax.f32 %v263, 0.0
  %v272 = vmax.f32 %v264, 0.0
  %v273 = vmax.f32 %v265, 0.0
  %v274 = vmax.f32 %v266, 0.0
  %v275 = vmax.f32 %v267, 0.0
  %vm276 = vcmask 7168
  %277 = vst.msk [vmem:[%s6] sm:$0xff] %vm276, %v268
  %278 = vst.msk [vmem:[%s6 + $0x8] sm:$0xff] %vm276, %v269
  %279 = vst.msk [vmem:[%s6 + $0x10] sm:$0xff] %vm276, %v270
  %280 = vst.msk [vmem:[%s6 + $0x18] sm:$0xff] %vm276, %v271
  %281 = vst.msk [vmem:[%s6 + $0x20] sm:$0xff] %vm276, %v272
  %282 = vst.msk [vmem:[%s6 + $0x28] sm:$0xff] %vm276, %v273
  %283 = vst.msk [vmem:[%s6 + $0x30] sm:$0xff] %vm276, %v274
  %284 = vst.msk [vmem:[%s6 + $0x38] sm:$0xff] %vm276, %v275
  // Predicated region
  $region26: #{tpu_custom_call.1} parent=0 // pred_check
    _
  $region27: #{tpu_custom_call.1} parent=0 // pred_check_branch
    %286 = sbr.rel (0) target = $region29
  $region28: #{tpu_custom_call.1} parent=0 // pred_region
    _
  $region29: #{tpu_custom_call.1} parent=0 // pred_fallthru
    _
  // Predicated region
  $region30: #{tpu_custom_call.1} parent=0 // pred_check
    _
  $region31: #{tpu_custom_call.1} parent=0 // pred_check_branch
    %288 = sbr.rel (0) target = $region33
  $region32: #{tpu_custom_call.1} parent=0 // pred_region
    _
  $region33: #{tpu_custom_call.1} parent=0 // pred_fallthru
    _

</llo_original>
